<compile_context>
chip_gen: v5e
topology: v5e:2x2
jax: 0.10.0
libtpu: 0.0.40
codegen_flags: <defaults>
</compile_context>

<pallas_src>
import functools

import jax
import jax.numpy as jnp
from jax import lax
from jax.experimental import pallas as pl
from jax.experimental.pallas import tpu as pltpu

LIGAND_DIM = 135
PROTEIN_DIM = 128
HIDDEN = 128
OUT = 1


def _cdiv(a, b):
    return -(-a // b)


def _round_up(x, m):
    return (x + m - 1) // m * m


def _choose_bm(B, block_b):
    """Batch-tile rows: multiple of 128 (lane-dense output), >= ~8 grid steps when possible."""
    if B < 128:
        return max(8, _round_up(B, 8))          # single exact block for tiny batches
    bm = min(block_b, _round_up(_cdiv(B, 8), 128))
    return int(min(max(bm, 128), 8192))


def _mlp_kernel(lig_ref, prot_ref, w1l_ref, w1p_ref, b1_ref, w2_ref, b2_ref, o_ref):
    # lig_ref:  (bm, 135) f32       w1l_ref: (135, 128) bf16 (resident)
    # prot_ref: (bm, 128) f32       w1p_ref: (128, 128) bf16 (resident)
    # b1_ref:   (1, 128)  f32       w2_ref:  (1, 128)   f32
    # b2_ref:   (1, 1)    f32 SMEM  o_ref:   (1, bm)    f32  (lane-dense)
    lig = lig_ref[...].astype(jnp.bfloat16)    # VPU cast on the streamed tile (no HBM pass)
    prot = prot_ref[...].astype(jnp.bfloat16)
    h = jnp.dot(lig, w1l_ref[...], preferred_element_type=jnp.float32)
    h = h + jnp.dot(prot, w1p_ref[...], preferred_element_type=jnp.float32)
    h = jnp.maximum(h + b1_ref[...], 0.0)      # Linear(263,128) + ReLU, f32
    # TODO(synk): nn.Dropout(p=0.2233) is identity at inference; training-mode dropout
    # (pltpu.prng_random_bits mask + 1/(1-p) scale) is not emitted here.
    # Linear(128,1): contract the hidden dim of h against the single w2 row so the result
    # lands directly in a lane-dense (1, bm) layout (unmasked stores). MXU has huge slack here.
    out = lax.dot_general(w2_ref[...], h, (((1,), (1,)), ((), ())),
                          preferred_element_type=jnp.float32)         # (1, bm)
    o_ref[...] = (out + b2_ref[0, 0]).astype(o_ref.dtype)


@functools.partial(jax.jit, static_argnames=("block_b",))
def affinity_predictor(ligand_vec, protein_vec, params, *, block_b=4096):
    """Fused forward pass of AffinityPredictor (eval mode).

    params = (w1, b1, w2, b2) in math layout:
      w1: (263, 128), b1: (128,), w2: (128, 1), b2: (1,)
    """
    w1, b1, w2, b2 = params
    B = ligand_vec.shape[0]

    # --- parameter prep (tiny, one-time; hoist offline in a real deployment) ---
    w1_lig = w1[:LIGAND_DIM].astype(jnp.bfloat16)     # (135, 128)
    w1_prot = w1[LIGAND_DIM:].astype(jnp.bfloat16)    # (128, 128)
    b1_row = jnp.reshape(b1, (1, HIDDEN)).astype(jnp.float32)
    w2_row = jnp.reshape(w2, (1, HIDDEN)).astype(jnp.float32)
    b2_s = jnp.reshape(b2, (1, 1)).astype(jnp.float32)

    bm = _choose_bm(B, block_b)
    nb = _cdiv(B, bm)   # ragged last block (if any) handled by Pallas boundary masking

    # --- VMEM budget from padded shapes (lane pads to 128, sublane to 8), double-buffered ---
    itm = jnp.dtype(ligand_vec.dtype).itemsize
    act_bytes = 2 * bm * (_round_up(LIGAND_DIM, 128) + _round_up(PROTEIN_DIM, 128)) * itm
    out_bytes = 2 * 8 * _round_up(bm, 128) * 4
    w_bytes = 2 * ((_round_up(LIGAND_DIM, 16) + PROTEIN_DIM) * HIDDEN * 2 + 2 * 8 * HIDDEN * 4)
    live_bytes = 2 * bm * HIDDEN * 4              # h + cast temporaries
    vmem_limit = int(min(max(act_bytes + out_bytes + w_bytes + live_bytes + (4 << 20),
                             16 << 20), 48 << 20))

    out_row = pl.pallas_call(
        _mlp_kernel,
        out_shape=jax.ShapeDtypeStruct((1, nb * bm), jnp.float32),
        grid=(nb,),
        in_specs=[
            pl.BlockSpec((bm, LIGAND_DIM), lambda i: (i, 0)),        # ligand rows (streamed)
            pl.BlockSpec((bm, PROTEIN_DIM), lambda i: (i, 0)),       # protein rows (streamed)
            pl.BlockSpec((LIGAND_DIM, HIDDEN), lambda i: (0, 0)),    # w1_lig (resident)
            pl.BlockSpec((PROTEIN_DIM, HIDDEN), lambda i: (0, 0)),   # w1_prot (resident)
            pl.BlockSpec((1, HIDDEN), lambda i: (0, 0)),             # b1
            pl.BlockSpec((1, HIDDEN), lambda i: (0, 0)),             # w2 row
            pl.BlockSpec(memory_space=pltpu.MemorySpace.SMEM),       # b2 scalar
        ],
        out_specs=pl.BlockSpec((1, bm), lambda i: (0, i)),           # lane-dense output row
        compiler_params=pltpu.CompilerParams(
            dimension_semantics=("parallel",),
            vmem_limit_bytes=vmem_limit,
        ),
    )(ligand_vec, protein_vec, w1_lig, w1_prot, b1_row, w2_row, b2_s)

    return out_row[0, :B][:, None]


def init_params(key):
    """Deterministic init mimicking PyTorch nn.Linear (uniform +/- 1/sqrt(fan_in))."""
    d_in = LIGAND_DIM + PROTEIN_DIM
    k1, k2, k3, k4 = jax.random.split(key, 4)
    lim1 = 1.0 / jnp.sqrt(d_in)
    lim2 = 1.0 / jnp.sqrt(HIDDEN)
    w1 = jax.random.uniform(k1, (d_in, HIDDEN), jnp.float32, -lim1, lim1)
    b1 = jax.random.uniform(k2, (HIDDEN,), jnp.float32, -lim1, lim1)
    w2 = jax.random.uniform(k3, (HIDDEN, OUT), jnp.float32, -lim2, lim2)
    b2 = jax.random.uniform(k4, (OUT,), jnp.float32, -lim2, lim2)
    return w1, b1, w2, b2


def reference_f32(ligand_vec, protein_vec, params):
    """Pure-f32 reference matching the PyTorch module's eval forward."""
    w1, b1, w2, b2 = params
    x = jnp.concatenate([ligand_vec, protein_vec], axis=1)
    h = jnp.maximum(x @ w1 + b1, 0.0)
    return h @ w2 + b2


def reference_matched(ligand_vec, protein_vec, params):
    """Reference with the same bf16 layer-1 / f32 layer-2 numerics as the kernel."""
    w1, b1, w2, b2 = params
    x = jnp.concatenate([ligand_vec, protein_vec], axis=1).astype(jnp.bfloat16)
    h = jnp.dot(x, w1.astype(jnp.bfloat16), preferred_element_type=jnp.float32) + b1
    h = jnp.maximum(h, 0.0)
    return jnp.dot(h, w2, precision=jax.lax.Precision.HIGHEST) + b2


if __name__ == "__main__":
    key = jax.random.PRNGKey(0)
    kp = jax.random.fold_in(key, 0)
    params = init_params(kp)

    for B in (8, 256):   # single exact block; and 2 lane-dense 128-row grid steps
        kl, kr = jax.random.split(jax.random.fold_in(key, B))
        ligand_vec = jax.random.normal(kl, (B, LIGAND_DIM), jnp.float32)
        protein_vec = jax.random.normal(kr, (B, PROTEIN_DIM), jnp.float32)

        out = jax.block_until_ready(affinity_predictor(ligand_vec, protein_vec, params))

        ref_m = reference_matched(ligand_vec, protein_vec, params)
        ref_f = reference_f32(ligand_vec, protein_vec, params)
        assert out.shape == (B, OUT), out.shape
        assert jnp.allclose(out, ref_m, atol=2e-3, rtol=2e-3), "mismatch vs bf16-matched reference"
        assert jnp.allclose(out, ref_f, atol=5e-2, rtol=5e-2), "mismatch vs f32 reference"

    print("KERNEL_OK")
</pallas_src>

<mosaic_0001>
module attributes {stable_mosaic.version = 11 : i64} {
  func.func @_mlp_kernel(%arg0: i32, %arg1: memref<8x135xf32, #tpu.memory_space<vmem>>, %arg2: memref<8x128xf32, #tpu.memory_space<vmem>>, %arg3: memref<135x128xbf16, #tpu.memory_space<vmem>>, %arg4: memref<128x128xbf16, #tpu.memory_space<vmem>>, %arg5: memref<1x128xf32, #tpu.memory_space<vmem>>, %arg6: memref<1x128xf32, #tpu.memory_space<vmem>>, %arg7: memref<1x1xf32, #tpu.memory_space<smem>>, %arg8: memref<1x8xf32, #tpu.memory_space<vmem>>) attributes {dimension_semantics = [#tpu.dimension_semantics<parallel>], iteration_bounds = array<i64: 1>, scalar_prefetch = 0 : i64, scratch_operands = 0 : i64, tpu.core_type = #tpu.core_type<tc>, window_params = [{transform_indices = @transform_0, window_bounds = array<i64: 8, 135>}, {transform_indices = @transform_1, window_bounds = array<i64: 8, 128>}, {pipeline_mode = #tpu.pipeline_mode<synchronous>, transform_indices = @transform_2, window_bounds = array<i64: 135, 128>}, {pipeline_mode = #tpu.pipeline_mode<synchronous>, transform_indices = @transform_3, window_bounds = array<i64: 128, 128>}, {pipeline_mode = #tpu.pipeline_mode<synchronous>, transform_indices = @transform_4, window_bounds = array<i64: 1, 128>}, {pipeline_mode = #tpu.pipeline_mode<synchronous>, transform_indices = @transform_5, window_bounds = array<i64: 1, 128>}, {transform_indices = @transform_6, window_bounds = array<i64: 1, 1>}, {transform_indices = @transform_7, window_bounds = array<i64: 1, 8>}]} {
    %c0 = arith.constant 0 : index
    %c0_0 = arith.constant 0 : index
    %0 = vector.load %arg1[%c0, %c0_0] : memref<8x135xf32, #tpu.memory_space<vmem>>, vector<8x135xf32>
    %1 = arith.truncf %0 : vector<8x135xf32> to vector<8x135xbf16>
    %c0_1 = arith.constant 0 : index
    %c0_2 = arith.constant 0 : index
    %2 = vector.load %arg2[%c0_1, %c0_2] : memref<8x128xf32, #tpu.memory_space<vmem>>, vector<8x128xf32>
    %3 = arith.truncf %2 : vector<8x128xf32> to vector<8x128xbf16>
    %c0_3 = arith.constant 0 : index
    %c0_4 = arith.constant 0 : index
    %4 = vector.load %arg3[%c0_3, %c0_4] : memref<135x128xbf16, #tpu.memory_space<vmem>>, vector<135x128xbf16>
    %cst = arith.constant dense<0.000000e+00> : vector<8x128xf32>
    %5 = tpu.matmul %1, %4, %cst {dimension_numbers = #tpu.dot_dimension_numbers<[1], [0], [0], [1], [0, 0, 1, 1], [], []>} : vector<8x135xbf16>, vector<135x128xbf16>, vector<8x128xf32> -> vector<8x128xf32>
    %c0_5 = arith.constant 0 : index
    %c0_6 = arith.constant 0 : index
    %6 = vector.load %arg4[%c0_5, %c0_6] : memref<128x128xbf16, #tpu.memory_space<vmem>>, vector<128x128xbf16>
    %cst_7 = arith.constant dense<0.000000e+00> : vector<8x128xf32>
    %7 = tpu.matmul %3, %6, %cst_7 {dimension_numbers = #tpu.dot_dimension_numbers<[1], [0], [0], [1], [0, 0, 1, 1], [], []>} : vector<8x128xbf16>, vector<128x128xbf16>, vector<8x128xf32> -> vector<8x128xf32>
    %8 = arith.addf %5, %7 : vector<8x128xf32>
    %c0_8 = arith.constant 0 : index
    %c0_9 = arith.constant 0 : index
    %9 = vector.load %arg5[%c0_8, %c0_9] : memref<1x128xf32, #tpu.memory_space<vmem>>, vector<1x128xf32>
    %10 = vector.broadcast %9 : vector<1x128xf32> to vector<8x128xf32>
    %11 = arith.addf %8, %10 : vector<8x128xf32>
    %cst_10 = arith.constant 0.000000e+00 : f32
    %12 = vector.broadcast %cst_10 : f32 to vector<8x128xf32>
    %13 = arith.maximumf %11, %12 : vector<8x128xf32>
    %c0_11 = arith.constant 0 : index
    %c0_12 = arith.constant 0 : index
    %14 = vector.load %arg6[%c0_11, %c0_12] : memref<1x128xf32, #tpu.memory_space<vmem>>, vector<1x128xf32>
    %cst_13 = arith.constant dense<0.000000e+00> : vector<1x8xf32>
    %15 = tpu.matmul %14, %13, %cst_13 {dimension_numbers = #tpu.dot_dimension_numbers<[1], [1], [0], [0], [0, 0, 1, 0], [], []>} : vector<1x128xf32>, vector<8x128xf32>, vector<1x8xf32> -> vector<1x8xf32>
    %c0_14 = arith.constant 0 : index
    %c0_15 = arith.constant 0 : index
    %16 = memref.load %arg7[%c0_14, %c0_15] : memref<1x1xf32, #tpu.memory_space<smem>>
    %17 = vector.broadcast %16 : f32 to vector<1x8xf32>
    %18 = arith.addf %15, %17 : vector<1x8xf32>
    %c0_16 = arith.constant 0 : index
    %c0_17 = arith.constant 0 : index
    %19 = vector.load %arg8[%c0_16, %c0_17] : memref<1x8xf32, #tpu.memory_space<vmem>>, vector<1x8xf32>
    tpu.vector_store %arg8[%c0_16, %c0_17], %18 {strides = array<i32>} : memref<1x8xf32, #tpu.memory_space<vmem>>, vector<1x8xf32>,
    return
  }
  func.func @transform_0(%arg0: i32) -> (i32, i32) {
    %c0_i32 = arith.constant 0 : i32
    %c0_i32_0 = arith.constant 0 : i32
    return %arg0, %c0_i32 : i32, i32
  }
  func.func @transform_1(%arg0: i32) -> (i32, i32) {
    %c0_i32 = arith.constant 0 : i32
    %c0_i32_0 = arith.constant 0 : i32
    return %arg0, %c0_i32 : i32, i32
  }
  func.func @transform_2(%arg0: i32) -> (i32, i32) {
    %c0_i32 = arith.constant 0 : i32
    %c0_i32_0 = arith.constant 0 : i32
    %c0_i32_1 = arith.constant 0 : i32
    return %c0_i32, %c0_i32_0 : i32, i32
  }
  func.func @transform_3(%arg0: i32) -> (i32, i32) {
    %c0_i32 = arith.constant 0 : i32
    %c0_i32_0 = arith.constant 0 : i32
    %c0_i32_1 = arith.constant 0 : i32
    return %c0_i32, %c0_i32_0 : i32, i32
  }
  func.func @transform_4(%arg0: i32) -> (i32, i32) {
    %c0_i32 = arith.constant 0 : i32
    %c0_i32_0 = arith.constant 0 : i32
    %c0_i32_1 = arith.constant 0 : i32
    return %c0_i32, %c0_i32_0 : i32, i32
  }
  func.func @transform_5(%arg0: i32) -> (i32, i32) {
    %c0_i32 = arith.constant 0 : i32
    %c0_i32_0 = arith.constant 0 : i32
    %c0_i32_1 = arith.constant 0 : i32
    return %c0_i32, %c0_i32_0 : i32, i32
  }
  func.func @transform_6(%arg0: i32) -> (i32, i32) {
    %c0_i32 = arith.constant 0 : i32
    %c0_i32_0 = arith.constant 0 : i32
    %c0_i32_1 = arith.constant 0 : i32
    return %c0_i32, %c0_i32_0 : i32, i32
  }
  func.func @transform_7(%arg0: i32) -> (i32, i32) {
    %c0_i32 = arith.constant 0 : i32
    %c0_i32_0 = arith.constant 0 : i32
    return %c0_i32, %arg0 : i32, i32
  }
}

</mosaic_0001>

<llo_original>
// kernel: affinity_predictor.1
$region0: #{affinity_predictor.1}
  #allocation0 [shape = 'u32[]', space=smem, size = 0x4, offset = 0x4, fixed_abs, tag = 'smem constant byte address 0x4 - core index']
  #allocation1 [shape = 'u32[72,128]{1,0:T(1,128)}', space=vmem, size = 0x9000, scoped, tag = 'internal scratch']
  #allocation2 [shape = 'f32[1,1]{1,0:T(1,128)S(6)}', space=smem, size = 0x200, scoped, tag = 'scoped memory for affinity_predictor.1']
  %s0 = inlined_call_operand.vmem [shape: f32[8,135], index: 0, kind: input, shape index: {}]
  %s1 = inlined_call_operand.vmem [shape: f32[8,128], index: 1, kind: input, shape index: {}]
  %s2 = inlined_call_operand.vmem [shape: bf16[135,128], index: 2, kind: input, shape index: {}]
  %s3 = inlined_call_operand.vmem [shape: bf16[128,128], index: 3, kind: input, shape index: {}]
  %s4 = inlined_call_operand.vmem [shape: f32[1,128], index: 4, kind: input, shape index: {}]
  %s5 = inlined_call_operand.vmem [shape: f32[1,128], index: 5, kind: input, shape index: {}]
  %s6 = inlined_call_operand.<no memory space> [shape: f32[1,1], index: 6, kind: input, shape index: {}]
  %s7 = inlined_call_operand.hbm [shape: f32[1,8], index: 7, kind: output, shape index: {}]
  %s8 = sld [smem:[#allocation0]]
  $region38: #{affinity_predictor.1} parent=0
    _
  %s10 = ssub.s32 1, %s8
  %s11 = scalar_select 0, %s10, %s8
  %12 = sst [smem:[#allocation2]] %s6
  $region1: #{affinity_predictor.1} parent=0
    #allocation3 [shape = 'u8[512]{0}', space=vmem, size = 0x400, scoped, tag = 'output window, operand 0, single buffered']
    #allocation4 [shape = 's32[1]{0}', space=sflag, size = 0x4, scoped, tag = 'scoped memory for affinity_predictor.1']
    %13 = vsyncpa [#allocation4], 0
    // Predicated region
    $region2: #{affinity_predictor.1} parent=1 // pred_check
      _
    $region3: #{affinity_predictor.1} parent=1 // pred_check_branch
      %15 = sbr.rel (0) target = $region5
    $region4: #{affinity_predictor.1} parent=1 // pred_region
      _
    $region5: #{affinity_predictor.1} parent=1 // pred_fallthru
      _
    // Predicated region
    $region6: #{affinity_predictor.1} parent=1 // pred_check
      _
    $region7: #{affinity_predictor.1} parent=1 // pred_check_branch
      %17 = sbr.rel (0) target = $region9
    $region8: #{affinity_predictor.1} parent=1 // pred_region
      _
    $region9: #{affinity_predictor.1} parent=1 // pred_fallthru
      _
    // Predicated region
    $region10: #{affinity_predictor.1} parent=1 // pred_check
      _
    $region11: #{affinity_predictor.1} parent=1 // pred_check_branch
      %19 = sbr.rel (0) target = $region13
    $region12: #{affinity_predictor.1} parent=1 // pred_region
      _
    $region13: #{affinity_predictor.1} parent=1 // pred_fallthru
      _
    // Predicated region
    $region14: #{affinity_predictor.1} parent=1 // pred_check
      _
    $region15: #{affinity_predictor.1} parent=1 // pred_check_branch
      %21 = sbr.rel (0) target = $region17
    $region16: #{affinity_predictor.1} parent=1 // pred_region
      _
    $region17: #{affinity_predictor.1} parent=1 // pred_fallthru
      _
    // Predicated region
    $region18: #{affinity_predictor.1} parent=1 // pred_check
      _
    $region19: #{affinity_predictor.1} parent=1 // pred_check_branch
      %23 = sbr.rel (0) target = $region21
    $region20: #{affinity_predictor.1} parent=1 // pred_region
      _
    $region21: #{affinity_predictor.1} parent=1 // pred_fallthru
      _
    // Predicated region
    $region22: #{affinity_predictor.1} parent=1 // pred_check
      _
    $region23: #{affinity_predictor.1} parent=1 // pred_check_branch
      %25 = sbr.rel (0) target = $region25
    $region24: #{affinity_predictor.1} parent=1 // pred_region
      _
    $region25: #{affinity_predictor.1} parent=1 // pred_fallthru
      _
    // Predicated region
    $region26: #{affinity_predictor.1} parent=1 // pred_check
      _
    $region27: #{affinity_predictor.1} parent=1 // pred_check_branch
      %27 = sbr.rel (0) target = $region29
    $region28: #{affinity_predictor.1} parent=1 // pred_region
      _
    $region29: #{affinity_predictor.1} parent=1 // pred_fallthru
      _
    %v29 = vld [vmem:[%s0] sm:$0xff]
    %v30 = vld [vmem:[%s0 + $0x8] sm:$0xff]
    %v31 = vpack.c.bf16 %v29, %v29
    %v32 = vpack.c.bf16 %v30, %v30
    %v33 = vld [vmem:[%s1] sm:$0xff]
    %v34 = vpack.c.bf16 %v33, %v33
    %v35 = vld [vmem:[%s2] sm:$0xf]
    %v36 = vld [vmem:[%s2 + $0x4] sm:$0xf]
    %v37 = vld [vmem:[%s2 + $0x8] sm:$0xf]
    %v38 = vld [vmem:[%s2 + $0xc] sm:$0xf]
    %v39 = vld [vmem:[%s2 + $0x10] sm:$0xf]
    %v40 = vld [vmem:[%s2 + $0x14] sm:$0xf]
    %v41 = vld [vmem:[%s2 + $0x18] sm:$0xf]
    %v42 = vld [vmem:[%s2 + $0x1c] sm:$0xf]
    %v43 = vld [vmem:[%s2 + $0x20] sm:$0xf]
    %v44 = vld [vmem:[%s2 + $0x24] sm:$0xf]
    %v45 = vld [vmem:[%s2 + $0x28] sm:$0xf]
    %v46 = vld [vmem:[%s2 + $0x2c] sm:$0xf]
    %v47 = vld [vmem:[%s2 + $0x30] sm:$0xf]
    %v48 = vld [vmem:[%s2 + $0x34] sm:$0xf]
    %v49 = vld [vmem:[%s2 + $0x38] sm:$0xf]
    %v50 = vld [vmem:[%s2 + $0x3c] sm:$0xf]
    %v51 = vld [vmem:[%s2 + $0x40] sm:$0xf]
    %v52 = vld [vmem:[%s3] sm:$0xf]
    %v53 = vld [vmem:[%s3 + $0x4] sm:$0xf]
    %v54 = vld [vmem:[%s3 + $0x8] sm:$0xf]
    %v55 = vld [vmem:[%s3 + $0xc] sm:$0xf]
    %v56 = vld [vmem:[%s3 + $0x10] sm:$0xf]
    %v57 = vld [vmem:[%s3 + $0x14] sm:$0xf]
    %v58 = vld [vmem:[%s3 + $0x18] sm:$0xf]
    %v59 = vld [vmem:[%s3 + $0x1c] sm:$0xf]
    %v60 = vld [vmem:[%s3 + $0x20] sm:$0xf]
    %v61 = vld [vmem:[%s3 + $0x24] sm:$0xf]
    %v62 = vld [vmem:[%s3 + $0x28] sm:$0xf]
    %v63 = vld [vmem:[%s3 + $0x2c] sm:$0xf]
    %v64 = vld [vmem:[%s3 + $0x30] sm:$0xf]
    %v65 = vld [vmem:[%s3 + $0x34] sm:$0xf]
    %v66 = vld [vmem:[%s3 + $0x38] sm:$0xf]
    %v67 = vld [vmem:[%s3 + $0x3c] sm:$0xf]
    %v84 = vunpack.c.l.b16 %v52
    %v85 = vunpack.c.l.b16 %v53
    %v86 = vunpack.c.l.b16 %v54
    %v87 = vunpack.c.l.b16 %v55
    %v88 = vunpack.c.l.b16 %v56
    %v89 = vunpack.c.l.b16 %v57
    %v90 = vunpack.c.l.b16 %v58
    %v91 = vunpack.c.l.b16 %v59
    %v92 = vunpack.c.l.b16 %v60
    %v93 = vunpack.c.l.b16 %v61
    %v94 = vunpack.c.l.b16 %v62
    %v95 = vunpack.c.l.b16 %v63
    %v96 = vunpack.c.l.b16 %v64
    %v97 = vunpack.c.l.b16 %v65
    %v98 = vunpack.c.l.b16 %v66
    %v99 = vunpack.c.l.b16 %v67
    %v100 = vpack.c.b16 %v85, %v84
    %v101 = vpack.c.b16 %v87, %v86
    %v102 = vpack.c.b16 %v89, %v88
    %v103 = vpack.c.b16 %v91, %v90
    %v104 = vpack.c.b16 %v93, %v92
    %v105 = vpack.c.b16 %v95, %v94
    %v106 = vpack.c.b16 %v97, %v96
    %v107 = vpack.c.b16 %v99, %v98
    %116 = vmatpush.bf16.msra.mxu0 %v107
    %117 = vmatpush.bf16.msra.mxu0 %v106
    %118 = vmatpush.bf16.msra.mxu0 %v105
    %119 = vmatpush.bf16.msra.mxu0 %v104
    %120 = vmatpush.bf16.msra.mxu0 %v103
    %121 = vmatpush.bf16.msra.mxu0 %v102
    %122 = vmatpush.bf16.msra.mxu0 %v101
    %123 = vmatpush.bf16.msra.mxu0 %v100
    %124 = vmatmul.bf16.gmra.mxu0 %v34
    %v125 = vpop.f32.mrf.mxu0
    %v126 = vadd.f32 0.0, %v125
    %v127 = vpop.f32.mrf.mxu0
    %128 = vdwg.mxu0
    %v146 = vunpack.c.l.b16 %v35
    %v147 = vunpack.c.l.b16 %v36
    %v148 = vunpack.c.l.b16 %v37
    %v149 = vunpack.c.l.b16 %v38
    %v150 = vunpack.c.l.b16 %v39
    %v151 = vunpack.c.l.b16 %v40
    %v152 = vunpack.c.l.b16 %v41
    %v153 = vunpack.c.l.b16 %v42
    %v154 = vunpack.c.l.b16 %v43
    %v155 = vunpack.c.l.b16 %v44
    %v156 = vunpack.c.l.b16 %v45
    %v157 = vunpack.c.l.b16 %v46
    %v158 = vunpack.c.l.b16 %v47
    %v159 = vunpack.c.l.b16 %v48
    %v160 = vunpack.c.l.b16 %v49
    %v161 = vunpack.c.l.b16 %v50
    %v162 = vunpack.c.l.b16 %v51
    %v163 = vpack.c.b16 %v147, %v146
    %v164 = vpack.c.b16 %v149, %v148
    %v165 = vpack.c.b16 %v151, %v150
    %v166 = vpack.c.b16 %v153, %v152
    %v167 = vpack.c.b16 %v155, %v154
    %v168 = vpack.c.b16 %v157, %v156
    %v169 = vpack.c.b16 %v159, %v158
    %v170 = vpack.c.b16 %v161, %v160
    %v171 = vpack.c.b16 %v162, %v162
    %vm180 = vcmask 56320
    %v182 = vsel %vm180, %v32, 0
    %vm184 = vcmask 1042432
    %vm185 = vcmask 1043456
    %v186 = vsel %vm184, 4294967295, 65535
    %v187 = vsel %vm185, %v186, 0
    %v189 = vand.u32 %v171, %v187
    %191 = vmatpush.bf16.msra.mxu0 %v170
    %192 = vmatpush.bf16.msra.mxu0 %v169
    %193 = vmatpush.bf16.msra.mxu0 %v168
    %194 = vmatpush.bf16.msra.mxu0 %v167
    %195 = vmatpush.bf16.msra.mxu0 %v166
    %196 = vmatpush.bf16.msra.mxu0 %v165
    %197 = vmatpush.bf16.msra.mxu0 %v164
    %198 = vmatpush.bf16.msra.mxu0 %v163
    %199 = vmatmul.bf16.gmra.mxu0 %v31
    %v200 = vpop.f32.mrf.mxu0
    %v201 = vadd.f32 %v126, %v200
    %v202 = vpop.f32.mrf.mxu0
    %203 = vdwg.mxu0
    %204 = vmatpush.bf16.msra.mxu0 0
    %205 = vmatpush.bf16.msra.mxu0 0
    %206 = vmatpush.bf16.msra.mxu0 0
    %207 = vmatpush.bf16.msra.mxu0 0
    %208 = vmatpush.bf16.msra.mxu0 0
    %209 = vmatpush.bf16.msra.mxu0 0
    %210 = vmatpush.bf16.msra.mxu0 0
    %211 = vmatpush.bf16.msra.mxu0 %v189
    %212 = vmatmul.bf16.gmra.mxu0 %v182
    %v213 = vpop.f32.mrf.mxu0
    %v214 = vadd.f32 %v201, %v213
    %v215 = vpop.f32.mrf.mxu0
    %216 = vdwg.mxu0
    %v217 = vld [vmem:[%s4] sm:$0x1]
    %v219 = vperm.slane %v217, 0
    %v221 = vadd.f32 %v214, %v219
    %v222 = vmax.f32 %v221, 0.0
    %v223 = vld [vmem:[%s5] sm:$0x1]
    %s224 = sld [smem:[#allocation2]]
    %v225 = vstv %s224
    %226 = vmatpush.xpose.msra.mxu0 0.0
    %227 = vmatpush.xpose.msra.mxu0 0.0
    %228 = vmatpush.xpose.msra.mxu0 0.0
    %229 = vmatpush.xpose.msra.mxu0 0.0
    %230 = vmatpush.xpose.msra.mxu0 0.0
    %231 = vmatpush.xpose.msra.mxu0 0.0
    %232 = vmatpush.xpose.msra.mxu0 0.0
    %233 = vmatpush.xpose.msra.mxu0 0.0
    %234 = vmatpush.xpose.msra.mxu0 0.0
    %235 = vmatpush.xpose.msra.mxu0 0.0
    %236 = vmatpush.xpose.msra.mxu0 0.0
    %237 = vmatpush.xpose.msra.mxu0 0.0
    %238 = vmatpush.xpose.msra.mxu0 0.0
    %239 = vmatpush.xpose.msra.mxu0 0.0
    %240 = vmatpush.xpose.msra.mxu0 0.0
    %241 = vmatpush.xpose.msra.mxu0 %v222
    %242 = vmatmul.f32.gmra.mxu0 %v223
    %v243 = vpop.f32.mrf.mxu0
    %v244 = vadd.f32 %v225, %v243
    %245 = vdwg.mxu0
    %vm246 = vcmask 57344
    %247 = vst.msk [vmem:[#allocation3] sm:$0x1] %vm246, %v244
    // Predicated region
    $region30: #{affinity_predictor.1} parent=1 // pred_check
      _
    $region31: #{affinity_predictor.1} parent=1 // pred_check_branch
      %249 = sbr.rel (0) target = $region33
    $region32: #{affinity_predictor.1} parent=1 // pred_region
      %251 = vsyncadd [#allocation4], 0
      %s253 = sshll.u32 [#allocation3], 4
      %s254 = int_to_ptr.vmem [resolvable:$true] %s253
      %s255 = sshll.u32 %s7, 4
      %s256 = int_to_ptr.hbm [resolvable:$true] %s255
      %258 = dma.vmem_to_hbm [thread:$0]  %s254, 16, %s256, [#allocation4]
    $region33: #{affinity_predictor.1} parent=1 // pred_fallthru
      _
    // Predicated region
    $region34: #{affinity_predictor.1} parent=1 // pred_check
      _
    $region35: #{affinity_predictor.1} parent=1 // pred_check_branch
      %260 = sbr.rel (0) target = $region37
    $region36: #{affinity_predictor.1} parent=1 // pred_region
      %262 = dma.done [#allocation4], 16
    $region37: #{affinity_predictor.1} parent=1 // pred_fallthru
      _
    %263 = vsyncpa [#allocation4], 1

</llo_original>
